<compile_context>
chip_gen: v7x
topology: tpu7x:2x2x1
jax: 0.10.0
libtpu: 0.0.40
codegen_flags: <defaults>
</compile_context>

<pallas_src>
import jax
import jax.numpy as jnp
import numpy as np
from jax import lax
from jax.experimental import pallas as pl
from jax.experimental.pallas import tpu as pltpu


def disc_spatial_kernel(x_ref, w1_ref, b1_ref, w2_ref, b2_ref, w3_ref, b3_ref,
                        out_ref):
    bb = x_ref.shape[0]          # batches in this tile
    n = x_ref.shape[2]           # num_nodes

    # --- Per-batch Gram over the time axis (f32, MXU, transposed-LHS) -------
    grams = []
    for b in range(bb):
        xb = x_ref[b].astype(jnp.float32)                      # (T, N)
        grams.append(lax.dot_general(
            xb, xb,
            dimension_numbers=(((0,), (0,)), ((), ())),        # contract T
            preferred_element_type=jnp.float32))               # (N, N)
    a = jnp.concatenate(grams, axis=0)                         # (BB*N, N)

    # --- Row-wise softmax (numerically stable, f32) -------------------------
    a = a - jnp.max(a, axis=-1, keepdims=True)
    e = jnp.exp(a)
    a = e * pl.reciprocal(jnp.sum(e, axis=-1, keepdims=True), approx=True)

    # --- MLP on all stacked rows at once (bf16 in, f32 accumulate) ----------
    h = jnp.dot(a.astype(jnp.bfloat16), w1_ref[...],
                preferred_element_type=jnp.float32) + b1_ref[...]
    h = jnp.where(h > 0, h, 0.2 * h)
    h = jnp.dot(h.astype(jnp.bfloat16), w2_ref[...],
                preferred_element_type=jnp.float32) + b2_ref[...]
    h = jnp.where(h > 0, h, 0.2 * h)                            # (BB*N, 256) f32

    # --- Final Linear(256, 1), computed transposed so the result is already
    #     lane-dense: (1,256) contracted with (BB*N,256) -> (1, BB*N). --------
    z = lax.dot_general(
        w3_ref[...], h,
        dimension_numbers=(((1,), (1,)), ((), ())),
        preferred_element_type=jnp.float32) + b3_ref[...]       # (1, BB*N)

    # Sigmoid with the divide on the EUP.
    out_ref[...] = pl.reciprocal(1.0 + jnp.exp(-z), approx=True).astype(
        out_ref.dtype)


def _pick_batches_per_step(batch, num_nodes, target_rows=256):
    """Largest divisor of `batch` such that BB*N roughly fills MXU rows."""
    want = max(1, min(batch, -(-target_rows // num_nodes)))     # ceil div
    for bb in range(want, 0, -1):
        if batch % bb == 0:
            return bb
    return 1


def discriminator_spatial(x, params):
    """x: (B, T, N, 1) or (B, T, N). Returns validity of shape (B*N, 1)."""
    if x.ndim == 4:
        x = jnp.squeeze(x, axis=-1)            # glue: mirrors torch .squeeze()
    B, T, N = x.shape
    w1, b1, w2, b2, w3, b3 = params
    H1 = w1.shape[1]   # 512
    H2 = w2.shape[1]   # 256

    BB = _pick_batches_per_step(B, N)
    num_tiles = B // BB

    # Layout / dtype plumbing (outside the kernel):
    w1b = w1.astype(jnp.bfloat16)
    w2b = w2.astype(jnp.bfloat16)
    w3r = w3.reshape(1, H2)                    # row layout for the final dot
    b3r = b3.reshape(1, 1)

    out = pl.pallas_call(
        disc_spatial_kernel,
        out_shape=jax.ShapeDtypeStruct((num_tiles, 1, BB * N), jnp.float32),
        grid=(num_tiles,),
        in_specs=[
            pl.BlockSpec((BB, T, N), lambda g: (g, 0, 0)),    # x tile of batches
            pl.BlockSpec((N, H1), lambda g: (0, 0)),          # W1 (bf16)
            pl.BlockSpec((1, H1), lambda g: (0, 0)),          # b1
            pl.BlockSpec((H1, H2), lambda g: (0, 0)),         # W2 (bf16)
            pl.BlockSpec((1, H2), lambda g: (0, 0)),          # b2
            pl.BlockSpec((1, H2), lambda g: (0, 0)),          # W3 as (1,256)
            pl.BlockSpec((1, 1), lambda g: (0, 0)),           # b3
        ],
        out_specs=pl.BlockSpec((None, 1, BB * N), lambda g: (g, 0, 0)),
        compiler_params=pltpu.CompilerParams(
            dimension_semantics=("parallel",)),
    )(x, w1b, b1, w2b, b2, w3r, b3r)

    return out.reshape(B * N, 1)


def make_params(num_nodes, key):
    """Deterministic synthetic weights (nn.Linear-style uniform init)."""
    dims = [(num_nodes, 512), (512, 256), (256, 1)]
    keys = jax.random.split(key, 2 * len(dims))
    params = []
    for i, (fan_in, fan_out) in enumerate(dims):
        bound = 1.0 / np.sqrt(fan_in)
        w = jax.random.uniform(keys[2 * i], (fan_in, fan_out),
                               minval=-bound, maxval=bound, dtype=jnp.float32)
        b = jax.random.uniform(keys[2 * i + 1], (1, fan_out),
                               minval=-bound, maxval=bound, dtype=jnp.float32)
        params += [w, b]
    return tuple(params)


def reference_forward(x, params):
    """Pure-JAX f32 reference mirroring the PyTorch forward."""
    if x.ndim == 4:
        x = jnp.squeeze(x, axis=-1)
    w1, b1, w2, b2, w3, b3 = params
    a = jnp.einsum('btn,btm->bnm', x, x)          # X^T @ X per batch
    a = jax.nn.softmax(a, axis=-1)
    h = a.reshape(-1, a.shape[-1])
    h1 = h @ w1 + b1
    h1 = jnp.where(h1 > 0, h1, 0.2 * h1)
    h2 = h1 @ w2 + b2
    h2 = jnp.where(h2 > 0, h2, 0.2 * h2)
    return jax.nn.sigmoid(h2 @ w3 + b3)


if __name__ == "__main__":
    # args.in_steps = 8 (window), args.num_nodes = 16
    B, T, N = 2, 8, 16
    key = jax.random.PRNGKey(0)
    kx, kp = jax.random.split(key)
    x = jax.random.normal(kx, (B, T, N, 1), dtype=jnp.float32)
    params = make_params(N, kp)

    validity = discriminator_spatial(x, params)
    validity = jax.block_until_ready(validity)

    ref = reference_forward(x, params)
    assert validity.shape == (B * N, 1)
    # Loosened tolerance: bf16 MLP matmuls (f32 accumulation) + approx EUP
    # reciprocals vs. the pure-f32 reference.
    np.testing.assert_allclose(np.asarray(validity), np.asarray(ref),
                               rtol=2e-2, atol=2e-2)
    print("KERNEL_OK")
</pallas_src>

<mosaic_0001>
module attributes {stable_mosaic.version = 11 : i64} {
  func.func @disc_spatial_kernel(%arg0: i32, %arg1: memref<2x8x16xf32, #tpu.memory_space<vmem>>, %arg2: memref<16x512xbf16, #tpu.memory_space<vmem>>, %arg3: memref<1x512xf32, #tpu.memory_space<vmem>>, %arg4: memref<512x256xbf16, #tpu.memory_space<vmem>>, %arg5: memref<1x256xf32, #tpu.memory_space<vmem>>, %arg6: memref<1x256xf32, #tpu.memory_space<vmem>>, %arg7: memref<1x1xf32, #tpu.memory_space<vmem>>, %arg8: memref<1x1x32xf32, #tpu.memory_space<vmem>>) attributes {dimension_semantics = [#tpu.dimension_semantics<parallel>], iteration_bounds = array<i64: 1>, scalar_prefetch = 0 : i64, scratch_operands = 0 : i64, tpu.core_type = #tpu.core_type<tc>, window_params = [{transform_indices = @transform_0, window_bounds = array<i64: 2, 8, 16>}, {pipeline_mode = #tpu.pipeline_mode<synchronous>, transform_indices = @transform_1, window_bounds = array<i64: 16, 512>}, {pipeline_mode = #tpu.pipeline_mode<synchronous>, transform_indices = @transform_2, window_bounds = array<i64: 1, 512>}, {pipeline_mode = #tpu.pipeline_mode<synchronous>, transform_indices = @transform_3, window_bounds = array<i64: 512, 256>}, {pipeline_mode = #tpu.pipeline_mode<synchronous>, transform_indices = @transform_4, window_bounds = array<i64: 1, 256>}, {pipeline_mode = #tpu.pipeline_mode<synchronous>, transform_indices = @transform_5, window_bounds = array<i64: 1, 256>}, {pipeline_mode = #tpu.pipeline_mode<synchronous>, transform_indices = @transform_6, window_bounds = array<i64: 1, 1>}, {transform_indices = @transform_7, window_bounds = array<i64: 1, 1, 32>}]} {
    %c0 = arith.constant 0 : index
    %c0_0 = arith.constant 0 : index
    %c0_1 = arith.constant 0 : index
    %0 = vector.load %arg1[%c0, %c0_0, %c0_1] : memref<2x8x16xf32, #tpu.memory_space<vmem>>, vector<1x8x16xf32>
    %1 = vector.shape_cast %0 : vector<1x8x16xf32> to vector<8x16xf32>
    %cst = arith.constant dense<0.000000e+00> : vector<16x16xf32>
    %2 = tpu.matmul %1, %1, %cst {dimension_numbers = #tpu.dot_dimension_numbers<[0], [0], [1], [1], [0, 1, 1, 1], [], []>} : vector<8x16xf32>, vector<8x16xf32>, vector<16x16xf32> -> vector<16x16xf32>
    %c1 = arith.constant 1 : index
    %c0_2 = arith.constant 0 : index
    %c0_3 = arith.constant 0 : index
    %3 = vector.load %arg1[%c1, %c0_2, %c0_3] : memref<2x8x16xf32, #tpu.memory_space<vmem>>, vector<1x8x16xf32>
    %4 = vector.shape_cast %3 : vector<1x8x16xf32> to vector<8x16xf32>
    %cst_4 = arith.constant dense<0.000000e+00> : vector<16x16xf32>
    %5 = tpu.matmul %4, %4, %cst_4 {dimension_numbers = #tpu.dot_dimension_numbers<[0], [0], [1], [1], [0, 1, 1, 1], [], []>} : vector<8x16xf32>, vector<8x16xf32>, vector<16x16xf32> -> vector<16x16xf32>
    %6 = tpu.concatenate %2, %5 in 0 : vector<16x16xf32>, vector<16x16xf32> -> vector<32x16xf32>
    %cst_5 = arith.constant dense<0xFF800000> : vector<32xf32>
    %7 = vector.multi_reduction <maximumf>, %6, %cst_5 [1] : vector<32x16xf32> to vector<32xf32>
    %8 = vector.shape_cast %7 : vector<32xf32> to vector<32x1xf32>
    %9 = vector.broadcast %8 : vector<32x1xf32> to vector<32x16xf32>
    %10 = arith.subf %6, %9 : vector<32x16xf32>
    %11 = math.exp %10 : vector<32x16xf32>
    %cst_6 = arith.constant dense<0.000000e+00> : vector<32xf32>
    %12 = vector.multi_reduction <add>, %11, %cst_6 [1] : vector<32x16xf32> to vector<32xf32>
    %13 = vector.shape_cast %12 : vector<32xf32> to vector<32x1xf32>
    %14 = tpu.reciprocal %13 {approx = true} : vector<32x1xf32> -> vector<32x1xf32>
    %15 = vector.broadcast %14 : vector<32x1xf32> to vector<32x16xf32>
    %16 = arith.mulf %11, %15 : vector<32x16xf32>
    %17 = arith.truncf %16 : vector<32x16xf32> to vector<32x16xbf16>
    %c0_7 = arith.constant 0 : index
    %c0_8 = arith.constant 0 : index
    %18 = vector.load %arg2[%c0_7, %c0_8] : memref<16x512xbf16, #tpu.memory_space<vmem>>, vector<16x512xbf16>
    %cst_9 = arith.constant dense<0.000000e+00> : vector<32x512xf32>
    %19 = tpu.matmul %17, %18, %cst_9 {dimension_numbers = #tpu.dot_dimension_numbers<[1], [0], [0], [1], [0, 0, 1, 1], [], []>} : vector<32x16xbf16>, vector<16x512xbf16>, vector<32x512xf32> -> vector<32x512xf32>
    %c0_10 = arith.constant 0 : index
    %c0_11 = arith.constant 0 : index
    %20 = vector.load %arg3[%c0_10, %c0_11] : memref<1x512xf32, #tpu.memory_space<vmem>>, vector<1x512xf32>
    %21 = vector.broadcast %20 : vector<1x512xf32> to vector<32x512xf32>
    %22 = arith.addf %19, %21 : vector<32x512xf32>
    %cst_12 = arith.constant 0.000000e+00 : f32
    %23 = vector.broadcast %cst_12 : f32 to vector<32x512xf32>
    %24 = arith.cmpf ogt, %22, %23 : vector<32x512xf32>
    %cst_13 = arith.constant 2.000000e-01 : f32
    %25 = vector.broadcast %cst_13 : f32 to vector<32x512xf32>
    %26 = arith.mulf %25, %22 : vector<32x512xf32>
    %27 = arith.select %24, %22, %26 : vector<32x512xi1>, vector<32x512xf32>
    %28 = arith.truncf %27 : vector<32x512xf32> to vector<32x512xbf16>
    %c0_14 = arith.constant 0 : index
    %c0_15 = arith.constant 0 : index
    %29 = vector.load %arg4[%c0_14, %c0_15] : memref<512x256xbf16, #tpu.memory_space<vmem>>, vector<512x256xbf16>
    %cst_16 = arith.constant dense<0.000000e+00> : vector<32x256xf32>
    %30 = tpu.matmul %28, %29, %cst_16 {dimension_numbers = #tpu.dot_dimension_numbers<[1], [0], [0], [1], [0, 0, 1, 1], [], []>} : vector<32x512xbf16>, vector<512x256xbf16>, vector<32x256xf32> -> vector<32x256xf32>
    %c0_17 = arith.constant 0 : index
    %c0_18 = arith.constant 0 : index
    %31 = vector.load %arg5[%c0_17, %c0_18] : memref<1x256xf32, #tpu.memory_space<vmem>>, vector<1x256xf32>
    %32 = vector.broadcast %31 : vector<1x256xf32> to vector<32x256xf32>
    %33 = arith.addf %30, %32 : vector<32x256xf32>
    %cst_19 = arith.constant 0.000000e+00 : f32
    %34 = vector.broadcast %cst_19 : f32 to vector<32x256xf32>
    %35 = arith.cmpf ogt, %33, %34 : vector<32x256xf32>
    %cst_20 = arith.constant 2.000000e-01 : f32
    %36 = vector.broadcast %cst_20 : f32 to vector<32x256xf32>
    %37 = arith.mulf %36, %33 : vector<32x256xf32>
    %38 = arith.select %35, %33, %37 : vector<32x256xi1>, vector<32x256xf32>
    %c0_21 = arith.constant 0 : index
    %c0_22 = arith.constant 0 : index
    %39 = vector.load %arg6[%c0_21, %c0_22] : memref<1x256xf32, #tpu.memory_space<vmem>>, vector<1x256xf32>
    %cst_23 = arith.constant dense<0.000000e+00> : vector<1x32xf32>
    %40 = tpu.matmul %39, %38, %cst_23 {dimension_numbers = #tpu.dot_dimension_numbers<[1], [1], [0], [0], [0, 0, 1, 0], [], []>} : vector<1x256xf32>, vector<32x256xf32>, vector<1x32xf32> -> vector<1x32xf32>
    %c0_24 = arith.constant 0 : index
    %c0_25 = arith.constant 0 : index
    %41 = vector.load %arg7[%c0_24, %c0_25] : memref<1x1xf32, #tpu.memory_space<vmem>>, vector<1x1xf32>
    %42 = vector.broadcast %41 : vector<1x1xf32> to vector<1x32xf32>
    %43 = arith.addf %40, %42 : vector<1x32xf32>
    %cst_26 = arith.constant 0.000000e+00 : f32
    %44 = vector.broadcast %cst_26 : f32 to vector<1x32xf32>
    %45 = arith.subf %44, %43 : vector<1x32xf32>
    %46 = math.exp %45 : vector<1x32xf32>
    %cst_27 = arith.constant 1.000000e+00 : f32
    %47 = vector.broadcast %cst_27 : f32 to vector<1x32xf32>
    %48 = arith.addf %47, %46 : vector<1x32xf32>
    %49 = tpu.reciprocal %48 {approx = true} : vector<1x32xf32> -> vector<1x32xf32>
    %c0_28 = arith.constant 0 : index
    %c0_29 = arith.constant 0 : index
    %c0_30 = arith.constant 0 : index
    %50 = vector.load %arg8[%c0_28, %c0_29, %c0_30] : memref<1x1x32xf32, #tpu.memory_space<vmem>>, vector<1x1x32xf32>
    %51 = vector.shape_cast %50 : vector<1x1x32xf32> to vector<1x32xf32>
    %52 = vector.shape_cast %49 : vector<1x32xf32> to vector<1x1x32xf32>
    tpu.vector_store %arg8[%c0_28, %c0_29, %c0_30], %52 {strides = array<i32>} : memref<1x1x32xf32, #tpu.memory_space<vmem>>, vector<1x1x32xf32>,
    return
  }
  func.func @transform_0(%arg0: i32) -> (i32, i32, i32) {
    %c0_i32 = arith.constant 0 : i32
    %c0_i32_0 = arith.constant 0 : i32
    %c0_i32_1 = arith.constant 0 : i32
    return %arg0, %c0_i32, %c0_i32_0 : i32, i32, i32
  }
  func.func @transform_1(%arg0: i32) -> (i32, i32) {
    %c0_i32 = arith.constant 0 : i32
    %c0_i32_0 = arith.constant 0 : i32
    %c0_i32_1 = arith.constant 0 : i32
    return %c0_i32, %c0_i32_0 : i32, i32
  }
  func.func @transform_2(%arg0: i32) -> (i32, i32) {
    %c0_i32 = arith.constant 0 : i32
    %c0_i32_0 = arith.constant 0 : i32
    %c0_i32_1 = arith.constant 0 : i32
    return %c0_i32, %c0_i32_0 : i32, i32
  }
  func.func @transform_3(%arg0: i32) -> (i32, i32) {
    %c0_i32 = arith.constant 0 : i32
    %c0_i32_0 = arith.constant 0 : i32
    %c0_i32_1 = arith.constant 0 : i32
    return %c0_i32, %c0_i32_0 : i32, i32
  }
  func.func @transform_4(%arg0: i32) -> (i32, i32) {
    %c0_i32 = arith.constant 0 : i32
    %c0_i32_0 = arith.constant 0 : i32
    %c0_i32_1 = arith.constant 0 : i32
    return %c0_i32, %c0_i32_0 : i32, i32
  }
  func.func @transform_5(%arg0: i32) -> (i32, i32) {
    %c0_i32 = arith.constant 0 : i32
    %c0_i32_0 = arith.constant 0 : i32
    %c0_i32_1 = arith.constant 0 : i32
    return %c0_i32, %c0_i32_0 : i32, i32
  }
  func.func @transform_6(%arg0: i32) -> (i32, i32) {
    %c0_i32 = arith.constant 0 : i32
    %c0_i32_0 = arith.constant 0 : i32
    %c0_i32_1 = arith.constant 0 : i32
    return %c0_i32, %c0_i32_0 : i32, i32
  }
  func.func @transform_7(%arg0: i32) -> (i32, i32, i32) {
    %c0_i32 = arith.constant 0 : i32
    %c0_i32_0 = arith.constant 0 : i32
    %c0_i32_1 = arith.constant 0 : i32
    return %arg0, %c0_i32, %c0_i32_0 : i32, i32, i32
  }
}

</mosaic_0001>

<llo_original>
// kernel: tpu_custom_call.1
$region0: #{tpu_custom_call.1}
  #allocation0 [shape = 'u32[]', space=smem, size = 0x4, offset = 0x4, fixed_abs, tag = 'smem constant byte address 0x4 - core index']
  #allocation1 [shape = 'u32[144,128]{1,0:T(1,128)}', space=vmem, size = 0x12000, scoped, tag = 'internal scratch']
  #allocation2 [shape = 'f32[1,1]{1,0:T(1,128)S(1)}', space=vmem, size = 0x200, scoped, tag = 'scoped memory for tpu_custom_call.1']
  %s0 = inlined_call_operand.hbm [shape: f32[2,8,16], index: 0, kind: input, shape index: {}]
  %s1 = inlined_call_operand.hbm [shape: bf16[16,512], index: 1, kind: input, shape index: {}]
  %s2 = inlined_call_operand.vmem [shape: f32[1,512], index: 2, kind: input, shape index: {}]
  %s3 = inlined_call_operand.hbm [shape: bf16[512,256], index: 3, kind: input, shape index: {}]
  %s4 = inlined_call_operand.vmem [shape: f32[1,256], index: 4, kind: input, shape index: {}]
  %s5 = inlined_call_operand.vmem [shape: f32[1,256], index: 5, kind: input, shape index: {}]
  %s6 = inlined_call_operand.<no memory space> [shape: f32[1,1], index: 6, kind: input, shape index: {}]
  %s7 = inlined_call_operand.hbm [shape: f32[1,1,32], index: 7, kind: output, shape index: {}]
  %s8 = sld [smem:[#allocation0]]
  $region50: #{tpu_custom_call.1} parent=0
    _
  %s10 = ssub.s32 1, %s8
  %s11 = scalar_select 0, %s10, %s8
  %v12 = vstv %s6
  %13 = vst [vmem:[#allocation2] sm:$0x1] %v12
  $region1: #{tpu_custom_call.1} parent=0
    #allocation3 [shape = 'u8[8192]{0}', space=vmem, size = 0x2000, scoped, tag = 'input window, operand 0, single buffered']
    #allocation4 [shape = 's32[1]{0}', space=sflag, size = 0x4, scoped, tag = 'scoped memory for tpu_custom_call.1']
    #allocation5 [shape = 's32[1]{0}', space=sflag, size = 0x4, scoped, tag = 'scoped memory for tpu_custom_call.1']
    #allocation6 [shape = 'u8[16384]{0}', space=vmem, size = 0x4000, scoped, tag = 'input window, operand 1, single buffered']
    #allocation7 [shape = 's32[1]{0}', space=sflag, size = 0x4, scoped, tag = 'scoped memory for tpu_custom_call.1']
    #allocation8 [shape = 'u8[262144]{0}', space=vmem, size = 0x40000, scoped, tag = 'input window, operand 3, single buffered']
    #allocation9 [shape = 'u8[512]{0}', space=vmem, size = 0x400, scoped, tag = 'output window, operand 0, single buffered']
    %14 = vsyncpa [#allocation4], 0
    %15 = vsyncpa [#allocation7], 0
    %16 = vsyncpa [#allocation5], 0
    // Predicated region
    $region2: #{tpu_custom_call.1} parent=1 // pred_check
      _
    $region3: #{tpu_custom_call.1} parent=1 // pred_check_branch
      %18 = sbr.rel (0) target = $region5
    $region4: #{tpu_custom_call.1} parent=1 // pred_region
      %s20 = ssub.s32 256, 256
      %21 = vsyncadd [#allocation4], %s20
      %s22 = sshll.u32 [#allocation3], 4
      %s23 = int_to_ptr.vmem [resolvable:$true] %s22
      %28 = dma.hbm_to_vmem [thread:$0]  %s0, 256, %s23, [#allocation4], 128, 128, 8
    $region5: #{tpu_custom_call.1} parent=1 // pred_fallthru
      _
    // Predicated region
    $region6: #{tpu_custom_call.1} parent=1 // pred_check
      _
    $region7: #{tpu_custom_call.1} parent=1 // pred_check_branch
      %30 = sbr.rel (0) target = $region9
    $region8: #{tpu_custom_call.1} parent=1 // pred_region
      %s32 = ssub.s32 512, 512
      %33 = vsyncadd [#allocation7], %s32
      %s34 = sshll.u32 [#allocation6], 4
      %s35 = int_to_ptr.vmem [resolvable:$true] %s34
      %40 = dma.hbm_to_vmem [thread:$0]  %s1, 512, %s35, [#allocation7], 256, 256, 16
    $region9: #{tpu_custom_call.1} parent=1 // pred_fallthru
      _
    // Predicated region
    $region10: #{tpu_custom_call.1} parent=1 // pred_check
      _
    $region11: #{tpu_custom_call.1} parent=1 // pred_check_branch
      %42 = sbr.rel (0) target = $region13
    $region12: #{tpu_custom_call.1} parent=1 // pred_region
      _
    $region13: #{tpu_custom_call.1} parent=1 // pred_fallthru
      _
    // Predicated region
    $region14: #{tpu_custom_call.1} parent=1 // pred_check
      _
    $region15: #{tpu_custom_call.1} parent=1 // pred_check_branch
      %44 = sbr.rel (0) target = $region17
    $region16: #{tpu_custom_call.1} parent=1 // pred_region
      %s46 = ssub.s32 8192, 8192
      %47 = vsyncadd [#allocation7], %s46
      %s48 = sshll.u32 [#allocation8], 4
      %s49 = int_to_ptr.vmem [resolvable:$true] %s48
      %54 = dma.hbm_to_vmem [thread:$0]  %s3, 8192, %s49, [#allocation7], 128, 128, 8
    $region17: #{tpu_custom_call.1} parent=1 // pred_fallthru
      _
    // Predicated region
    $region18: #{tpu_custom_call.1} parent=1 // pred_check
      _
    $region19: #{tpu_custom_call.1} parent=1 // pred_check_branch
      %56 = sbr.rel (0) target = $region21
    $region20: #{tpu_custom_call.1} parent=1 // pred_region
      _
    $region21: #{tpu_custom_call.1} parent=1 // pred_fallthru
      _
    // Predicated region
    $region22: #{tpu_custom_call.1} parent=1 // pred_check
      _
    $region23: #{tpu_custom_call.1} parent=1 // pred_check_branch
      %58 = sbr.rel (0) target = $region25
    $region24: #{tpu_custom_call.1} parent=1 // pred_region
      _
    $region25: #{tpu_custom_call.1} parent=1 // pred_fallthru
      _
    // Predicated region
    $region26: #{tpu_custom_call.1} parent=1 // pred_check
      _
    $region27: #{tpu_custom_call.1} parent=1 // pred_check_branch
      %60 = sbr.rel (0) target = $region29
    $region28: #{tpu_custom_call.1} parent=1 // pred_region
      _
    $region29: #{tpu_custom_call.1} parent=1 // pred_fallthru
      _
    // Predicated region
    $region30: #{tpu_custom_call.1} parent=1 // pred_check
      _
    $region31: #{tpu_custom_call.1} parent=1 // pred_check_branch
      %62 = sbr.rel (0) target = $region33
    $region32: #{tpu_custom_call.1} parent=1 // pred_region
      %63 = dma.done [#allocation4], 256
    $region33: #{tpu_custom_call.1} parent=1 // pred_fallthru
      _
    // Predicated region
    $region34: #{tpu_custom_call.1} parent=1 // pred_check
      _
    $region35: #{tpu_custom_call.1} parent=1 // pred_check_branch
      %65 = sbr.rel (0) target = $region37
    $region36: #{tpu_custom_call.1} parent=1 // pred_region
      %66 = dma.done [#allocation7], 512
    $region37: #{tpu_custom_call.1} parent=1 // pred_fallthru
      _
    // Predicated region
    $region38: #{tpu_custom_call.1} parent=1 // pred_check
      _
    $region39: #{tpu_custom_call.1} parent=1 // pred_check_branch
      %68 = sbr.rel (0) target = $region41
    $region40: #{tpu_custom_call.1} parent=1 // pred_region
      %69 = dma.done [#allocation7], 8192
    $region41: #{tpu_custom_call.1} parent=1 // pred_fallthru
      _
    %v71 = vld [vmem:[#allocation3] sm:$0xff]
    %72 = vxpose.xlu0.b32.start [1/16] %v71, 128
    %73 = vxpose.xlu0.b32.cont [2/16] 0.0, 128
    %74 = vxpose.xlu0.b32.cont [3/16] 0.0, 128
    %75 = vxpose.xlu0.b32.cont [4/16] 0.0, 128
    %76 = vxpose.xlu0.b32.cont [5/16] 0.0, 128
    %77 = vxpose.xlu0.b32.cont [6/16] 0.0, 128
    %78 = vxpose.xlu0.b32.cont [7/16] 0.0, 128
    %79 = vxpose.xlu0.b32.cont [8/16] 0.0, 128
    %80 = vxpose.xlu0.b32.cont [9/16] 0.0, 128
    %81 = vxpose.xlu0.b32.cont [10/16] 0.0, 128
    %82 = vxpose.xlu0.b32.cont [11/16] 0.0, 128
    %83 = vxpose.xlu0.b32.cont [12/16] 0.0, 128
    %84 = vxpose.xlu0.b32.cont [13/16] 0.0, 128
    %85 = vxpose.xlu0.b32.cont [14/16] 0.0, 128
    %86 = vxpose.xlu0.b32.cont [15/16] 0.0, 128
    %87 = vxpose.xlu0.b32.end [16/16] 0.0, 128
    %v88 = vpop.trf.xlu0
    %v89 = vpop.trf.xlu0
    %v90 = vpop.trf.xlu0
    %v91 = vpop.trf.xlu0
    %v92 = vpop.trf.xlu0
    %v93 = vpop.trf.xlu0
    %v94 = vpop.trf.xlu0
    %v95 = vpop.trf.xlu0
    %v96 = vpop.trf.xlu0
    %v97 = vpop.trf.xlu0
    %v98 = vpop.trf.xlu0
    %v99 = vpop.trf.xlu0
    %v100 = vpop.trf.xlu0
    %v101 = vpop.trf.xlu0
    %v102 = vpop.trf.xlu0
    %v103 = vpop.trf.xlu0
    %vm104 = vcmask 64512
    %v106 = vsel %vm104, %v88, 0
    %v109 = vsel %vm104, %v89, 0
    %111 = vmatprep.subr.mxu0 0.0
    %112 = vmatpush1.msra.mxu0 %v71
    %113 = vmatprep.subr.mxu0 0.0
    %114 = vmatpush1.msra.mxu0 0.0
    %115 = vmatprep.subr.mxu0 0.0
    %116 = vmatpush1.msra.mxu0 0.0
    %117 = vmatprep.subr.mxu0 0.0
    %118 = vmatpush1.msra.mxu0 0.0
    %119 = vmatprep.subr.mxu0 0.0
    %120 = vmatpush1.msra.mxu0 0.0
    %121 = vmatprep.subr.mxu0 0.0
    %122 = vmatpush1.msra.mxu0 0.0
    %123 = vmatprep.subr.mxu0 0.0
    %124 = vmatpush1.msra.mxu0 0.0
    %125 = vmatprep.subr.mxu0 0.0
    %126 = vmatpush1.msra.mxu0 0.0
    %127 = vmatprep.subr.mxu0 0.0
    %128 = vmatpush1.msra.mxu0 0.0
    %129 = vmatprep.subr.mxu0 0.0
    %130 = vmatpush1.msra.mxu0 0.0
    %131 = vmatprep.subr.mxu0 0.0
    %132 = vmatpush1.msra.mxu0 0.0
    %133 = vmatprep.subr.mxu0 0.0
    %134 = vmatpush1.msra.mxu0 0.0
    %135 = vmatprep.subr.mxu0 0.0
    %136 = vmatpush1.msra.mxu0 0.0
    %137 = vmatprep.subr.mxu0 0.0
    %138 = vmatpush1.msra.mxu0 0.0
    %139 = vmatprep.subr.mxu0 0.0
    %140 = vmatpush1.msra.mxu0 0.0
    %141 = vmatprep.subr.mxu0 0.0
    %142 = vmatpush1.msra.mxu0 0.0
    %143 = vmatprep.subr.mxu0 0.0
    %144 = vmatpush1.msra.mxu0 0.0
    %145 = vmatprep.subr.mxu0 0.0
    %146 = vmatpush1.msra.mxu0 0.0
    %147 = vmatprep.subr.mxu0 0.0
    %148 = vmatpush1.msra.mxu0 0.0
    %149 = vmatprep.subr.mxu0 0.0
    %150 = vmatpush1.msra.mxu0 0.0
    %151 = vmatprep.subr.mxu0 0.0
    %152 = vmatpush1.msra.mxu0 0.0
    %153 = vmatprep.subr.mxu0 0.0
    %154 = vmatpush1.msra.mxu0 0.0
    %155 = vmatprep.subr.mxu0 0.0
    %156 = vmatpush1.msra.mxu0 0.0
    %157 = vmatprep.subr.mxu0 0.0
    %158 = vmatpush1.msra.mxu0 0.0
    %159 = vmatprep.subr.mxu0 0.0
    %160 = vmatpush1.msra.mxu0 0.0
    %161 = vmatprep.subr.mxu0 0.0
    %162 = vmatpush1.msra.mxu0 0.0
    %163 = vmatprep.subr.mxu0 0.0
    %164 = vmatpush1.msra.mxu0 0.0
    %165 = vmatprep.subr.mxu0 0.0
    %166 = vmatpush1.msra.mxu0 0.0
    %167 = vmatprep.subr.mxu0 0.0
    %168 = vmatpush1.msra.mxu0 0.0
    %169 = vmatprep.subr.mxu0 0.0
    %170 = vmatpush1.msra.mxu0 0.0
    %171 = vmatprep.subr.mxu0 0.0
    %172 = vmatpush1.msra.mxu0 0.0
    %173 = vmatprep.subr.mxu0 0.0
    %174 = vmatpush1.msra.mxu0 0.0
    %175 = vmatprep.mubr.f32.mxu0 0.0
    %176 = vmatmul.mubr.f32.gmra.mrb[0].mxu0 %v106
    %v177 = vpop.f32.mrb[0].mxu0
    %v178 = vadd.f32 0.0, %v177
    %v179 = vpop.f32.mrb[0].mxu0
    %180 = vmatprep.mubr.f32.mxu0 0.0
    %181 = vmatmul.mubr.f32.gmra.mrb[0].mxu0 %v109
    %v182 = vpop.f32.mrb[0].mxu0
    %v183 = vadd.f32 0.0, %v182
    %v184 = vpop.f32.mrb[0].mxu0
    %185 = vdwg.mxu0
    %s186 = scalar_lea.vmem [#allocation3], 8
    %v187 = vld [vmem:[%s186] sm:$0xff]
    %188 = vxpose.xlu0.b32.start [1/16] %v187, 128
    %189 = vxpose.xlu0.b32.cont [2/16] 0.0, 128
    %190 = vxpose.xlu0.b32.cont [3/16] 0.0, 128
    %191 = vxpose.xlu0.b32.cont [4/16] 0.0, 128
    %192 = vxpose.xlu0.b32.cont [5/16] 0.0, 128
    %193 = vxpose.xlu0.b32.cont [6/16] 0.0, 128
    %194 = vxpose.xlu0.b32.cont [7/16] 0.0, 128
    %195 = vxpose.xlu0.b32.cont [8/16] 0.0, 128
    %196 = vxpose.xlu0.b32.cont [9/16] 0.0, 128
    %197 = vxpose.xlu0.b32.cont [10/16] 0.0, 128
    %198 = vxpose.xlu0.b32.cont [11/16] 0.0, 128
    %199 = vxpose.xlu0.b32.cont [12/16] 0.0, 128
    %200 = vxpose.xlu0.b32.cont [13/16] 0.0, 128
    %201 = vxpose.xlu0.b32.cont [14/16] 0.0, 128
    %202 = vxpose.xlu0.b32.cont [15/16] 0.0, 128
    %203 = vxpose.xlu0.b32.end [16/16] 0.0, 128
    %v204 = vpop.trf.xlu0
    %v205 = vpop.trf.xlu0
    %v206 = vpop.trf.xlu0
    %v207 = vpop.trf.xlu0
    %v208 = vpop.trf.xlu0
    %v209 = vpop.trf.xlu0
    %v210 = vpop.trf.xlu0
    %v211 = vpop.trf.xlu0
    %v212 = vpop.trf.xlu0
    %v213 = vpop.trf.xlu0
    %v214 = vpop.trf.xlu0
    %v215 = vpop.trf.xlu0
    %v216 = vpop.trf.xlu0
    %v217 = vpop.trf.xlu0
    %v218 = vpop.trf.xlu0
    %v219 = vpop.trf.xlu0
    %v221 = vsel %vm104, %v204, 0
    %v224 = vsel %vm104, %v205, 0
    %226 = vmatprep.subr.mxu0 0.0
    %227 = vmatpush1.msra.mxu0 %v187
    %228 = vmatprep.subr.mxu0 0.0
    %229 = vmatpush1.msra.mxu0 0.0
    %230 = vmatprep.subr.mxu0 0.0
    %231 = vmatpush1.msra.mxu0 0.0
    %232 = vmatprep.subr.mxu0 0.0
    %233 = vmatpush1.msra.mxu0 0.0
    %234 = vmatprep.subr.mxu0 0.0
    %235 = vmatpush1.msra.mxu0 0.0
    %236 = vmatprep.subr.mxu0 0.0
    %237 = vmatpush1.msra.mxu0 0.0
    %238 = vmatprep.subr.mxu0 0.0
    %239 = vmatpush1.msra.mxu0 0.0
    %240 = vmatprep.subr.mxu0 0.0
    %241 = vmatpush1.msra.mxu0 0.0
    %242 = vmatprep.subr.mxu0 0.0
    %243 = vmatpush1.msra.mxu0 0.0
    %244 = vmatprep.subr.mxu0 0.0
    %245 = vmatpush1.msra.mxu0 0.0
    %246 = vmatprep.subr.mxu0 0.0
    %247 = vmatpush1.msra.mxu0 0.0
    %248 = vmatprep.subr.mxu0 0.0
    %249 = vmatpush1.msra.mxu0 0.0
    %250 = vmatprep.subr.mxu0 0.0
    %251 = vmatpush1.msra.mxu0 0.0
    %252 = vmatprep.subr.mxu0 0.0
    %253 = vmatpush1.msra.mxu0 0.0
    %254 = vmatprep.subr.mxu0 0.0
    %255 = vmatpush1.msra.mxu0 0.0
    %256 = vmatprep.subr.mxu0 0.0
    %257 = vmatpush1.msra.mxu0 0.0
    %258 = vmatprep.subr.mxu0 0.0
    %259 = vmatpush1.msra.mxu0 0.0
    %260 = vmatprep.subr.mxu0 0.0
    %261 = vmatpush1.msra.mxu0 0.0
    %262 = vmatprep.subr.mxu0 0.0
    %263 = vmatpush1.msra.mxu0 0.0
    %264 = vmatprep.subr.mxu0 0.0
    %265 = vmatpush1.msra.mxu0 0.0
    %266 = vmatprep.subr.mxu0 0.0
    %267 = vmatpush1.msra.mxu0 0.0
    %268 = vmatprep.subr.mxu0 0.0
    %269 = vmatpush1.msra.mxu0 0.0
    %270 = vmatprep.subr.mxu0 0.0
    %271 = vmatpush1.msra.mxu0 0.0
    %272 = vmatprep.subr.mxu0 0.0
    %273 = vmatpush1.msra.mxu0 0.0
    %274 = vmatprep.subr.mxu0 0.0
    %275 = vmatpush1.msra.mxu0 0.0
    %276 = vmatprep.subr.mxu0 0.0
    %277 = vmatpush1.msra.mxu0 0.0
    %278 = vmatprep.subr.mxu0 0.0
    %279 = vmatpush1.msra.mxu0 0.0
    %280 = vmatprep.subr.mxu0 0.0
    %281 = vmatpush1.msra.mxu0 0.0
    %282 = vmatprep.subr.mxu0 0.0
    %283 = vmatpush1.msra.mxu0 0.0
    %284 = vmatprep.subr.mxu0 0.0
    %285 = vmatpush1.msra.mxu0 0.0
    %286 = vmatprep.subr.mxu0 0.0
    %287 = vmatpush1.msra.mxu0 0.0
    %288 = vmatprep.subr.mxu0 0.0
    %289 = vmatpush1.msra.mxu0 0.0
    %290 = vmatprep.mubr.f32.mxu0 0.0
    %291 = vmatmul.mubr.f32.gmra.mrb[0].mxu0 %v221
    %v292 = vpop.f32.mrb[0].mxu0
    %v293 = vadd.f32 0.0, %v292
    %v294 = vpop.f32.mrb[0].mxu0
    %295 = vmatprep.mubr.f32.mxu0 0.0
    %296 = vmatmul.mubr.f32.gmra.mrb[0].mxu0 %v224
    %v297 = vpop.f32.mrb[0].mxu0
    %v298 = vadd.f32 0.0, %v297
    %v299 = vpop.f32.mrb[0].mxu0
    %300 = vdwg.mxu0
    %vm301 = vcmask 130048
    %v302 = vsel %vm301, %v178, -inf
    %303 = vmax.xlane.f32.xlu0 %v302
    %v304 = vpop.xlane.xlu0 %303
    %v305 = vsel %vm301, %v183, -inf
    %306 = vmax.xlane.f32.xlu0 %v305
    %v307 = vpop.xlane.xlu0 %306
    %v308 = vsel %vm301, %v293, -inf
    %309 = vmax.xlane.f32.xlu0 %v308
    %v310 = vpop.xlane.xlu0 %309
    %v311 = vsel %vm301, %v298, -inf
    %312 = vmax.xlane.f32.xlu0 %v311
    %v313 = vpop.xlane.xlu0 %312
    %v314 = vsub.f32 %v178, %v304
    %v315 = vsub.f32 %v183, %v307
    %v316 = vsub.f32 %v293, %v310
    %v317 = vsub.f32 %v298, %v313
    %v318 = vmul.f32 %v314, 1.442695
    %v319 = vpow.pop %v318
    %v320 = vmul.f32 %v315, 1.442695
    %v321 = vpow.pop %v320
    %v322 = vmul.f32 %v316, 1.442695
    %v323 = vpow.pop %v322
    %v324 = vmul.f32 %v317, 1.442695
    %v325 = vpow.pop %v324
    %v326 = vsel %vm301, %v319, 0.0
    %327 = vadd.xlane.f32.xlu0 %v326
    %v328 = vpop.xlane.xlu0 %327
    %v329 = vsel %vm301, %v321, 0.0
    %330 = vadd.xlane.f32.xlu0 %v329
    %v331 = vpop.xlane.xlu0 %330
    %v332 = vsel %vm301, %v323, 0.0
    %333 = vadd.xlane.f32.xlu0 %v332
    %v334 = vpop.xlane.xlu0 %333
    %v335 = vsel %vm301, %v325, 0.0
    %336 = vadd.xlane.f32.xlu0 %v335
    %v337 = vpop.xlane.xlu0 %336
    %v338 = vrcp.pop %v328
    %v339 = vrcp.pop %v331
    %v340 = vrcp.pop %v334
    %v341 = vrcp.pop %v337
    %v342 = vmul.f32 %v319, %v338
    %v343 = vmul.f32 %v321, %v339
    %v344 = vmul.f32 %v323, %v340
    %v345 = vmul.f32 %v325, %v341
    %v346 = vpack.c.bf16 %v343, %v342
    %v347 = vpack.c.bf16 %v345, %v344
    %v348 = vld [vmem:[#allocation6] sm:$0xff]
    %v349 = vld [vmem:[#allocation6 + $0x8] sm:$0xff]
    %v350 = vld [vmem:[#allocation6 + $0x10] sm:$0xff]
    %v351 = vld [vmem:[#allocation6 + $0x18] sm:$0xff]
    %v352 = vld [vmem:[%s2] sm:$0xf]
    %v354 = vlaneseq
    %v355 = vshrl.u32 %v354, 7
    %v356 = vsub.s32 0, %v355
    %v357 = vrot.slane %v352, %v356
    %v358 = vlaneseq
    %v359 = vshrl.u32 %v358, 7
    %v360 = vsub.s32 1, %v359
    %v361 = vrot.slane %v352, %v360
    %v362 = vlaneseq
    %v363 = vshrl.u32 %v362, 7
    %v364 = vsub.s32 2, %v363
    %v365 = vrot.slane %v352, %v364
    %v366 = vlaneseq
    %v367 = vshrl.u32 %v366, 7
    %v368 = vsub.s32 3, %v367
    %v369 = vrot.slane %v352, %v368
    %v378 = vunpack.c.l.b16 %v348
    %v379 = vunpack.c.h.b16 %v348
    %v380 = vunpack.c.l.b16 %v349
    %v381 = vunpack.c.h.b16 %v349
    %v382 = vunpack.c.l.b16 %v350
    %v383 = vunpack.c.h.b16 %v350
    %v384 = vunpack.c.l.b16 %v351
    %v385 = vunpack.c.h.b16 %v351
    %v386 = vpack.c.b16 %v382, %v378
    %v387 = vpack.c.b16 %v383, %v379
    %v388 = vpack.c.b16 %v384, %v380
    %v389 = vpack.c.b16 %v385, %v381
    %v395 = vsel %vm301, %v346, 0
    %v398 = vsel %vm301, %v347, 0
    %400 = vmatprep.subr.bf16.mxu0 %v387
    %401 = vmatpush1.bf16.msra.mxu0 %v386
    %402 = vmatprep.subr.bf16.mxu0 0
    %403 = vmatpush1.bf16.msra.mxu0 0
    %404 = vmatprep.subr.bf16.mxu0 0
    %405 = vmatpush1.bf16.msra.mxu0 0
    %406 = vmatprep.subr.bf16.mxu0 0
    %407 = vmatpush1.bf16.msra.mxu0 0
    %408 = vmatprep.subr.bf16.mxu0 0
    %409 = vmatpush1.bf16.msra.mxu0 0
    %410 = vmatprep.subr.bf16.mxu0 0
    %411 = vmatpush1.bf16.msra.mxu0 0
    %412 = vmatprep.subr.bf16.mxu0 0
    %413 = vmatpush1.bf16.msra.mxu0 0
    %414 = vmatprep.subr.bf16.mxu0 0
    %415 = vmatpush1.bf16.msra.mxu0 0
    %416 = vmatprep.subr.bf16.mxu0 0
    %417 = vmatpush1.bf16.msra.mxu0 0
    %418 = vmatprep.subr.bf16.mxu0 0
    %419 = vmatpush1.bf16.msra.mxu0 0
    %420 = vmatprep.subr.bf16.mxu0 0
    %421 = vmatpush1.bf16.msra.mxu0 0
    %422 = vmatprep.subr.bf16.mxu0 0
    %423 = vmatpush1.bf16.msra.mxu0 0
    %424 = vmatprep.subr.bf16.mxu0 0
    %425 = vmatpush1.bf16.msra.mxu0 0
    %426 = vmatprep.subr.bf16.mxu0 0
    %427 = vmatpush1.bf16.msra.mxu0 0
    %428 = vmatprep.subr.bf16.mxu0 0
    %429 = vmatpush1.bf16.msra.mxu0 0
    %430 = vmatprep.subr.bf16.mxu0 0
    %431 = vmatpush1.bf16.msra.mxu0 0
    %432 = vmatprep.mubr.bf16.mxu0 0
    %433 = vmatmul.mubr.bf16.gmra.mrb[0].mxu0 %v395
    %v434 = vpop.f32.mrb[0].mxu0
    %v435 = vadd.f32 %v357, %v434
    %v436 = vpop.f32.mrb[0].mxu0
    %v437 = vadd.f32 %v361, %v436
    %v438 = vpop.f32.mrb[0].mxu0
    %v439 = vadd.f32 %v357, %v438
    %v440 = vpop.f32.mrb[0].mxu0
    %v441 = vadd.f32 %v361, %v440
    %442 = vmatprep.mubr.bf16.mxu0 0
    %443 = vmatmul.mubr.bf16.gmra.mrb[0].mxu0 %v398
    %v444 = vpop.f32.mrb[0].mxu0
    %v445 = vadd.f32 %v357, %v444
    %v446 = vpop.f32.mrb[0].mxu0
    %v447 = vadd.f32 %v361, %v446
    %v448 = vpop.f32.mrb[0].mxu0
    %v449 = vadd.f32 %v357, %v448
    %v450 = vpop.f32.mrb[0].mxu0
    %v451 = vadd.f32 %v361, %v450
    %452 = vdwg.mxu0
    %453 = vmatprep.subr.bf16.mxu0 %v389
    %454 = vmatpush1.bf16.msra.mxu0 %v388
    %455 = vmatprep.subr.bf16.mxu0 0
    %456 = vmatpush1.bf16.msra.mxu0 0
    %457 = vmatprep.subr.bf16.mxu0 0
    %458 = vmatpush1.bf16.msra.mxu0 0
    %459 = vmatprep.subr.bf16.mxu0 0
    %460 = vmatpush1.bf16.msra.mxu0 0
    %461 = vmatprep.subr.bf16.mxu0 0
    %462 = vmatpush1.bf16.msra.mxu0 0
    %463 = vmatprep.subr.bf16.mxu0 0
    %464 = vmatpush1.bf16.msra.mxu0 0
    %465 = vmatprep.subr.bf16.mxu0 0
    %466 = vmatpush1.bf16.msra.mxu0 0
    %467 = vmatprep.subr.bf16.mxu0 0
    %468 = vmatpush1.bf16.msra.mxu0 0
    %469 = vmatprep.subr.bf16.mxu0 0
    %470 = vmatpush1.bf16.msra.mxu0 0
    %471 = vmatprep.subr.bf16.mxu0 0
    %472 = vmatpush1.bf16.msra.mxu0 0
    %473 = vmatprep.subr.bf16.mxu0 0
    %474 = vmatpush1.bf16.msra.mxu0 0
    %475 = vmatprep.subr.bf16.mxu0 0
    %476 = vmatpush1.bf16.msra.mxu0 0
    %477 = vmatprep.subr.bf16.mxu0 0
    %478 = vmatpush1.bf16.msra.mxu0 0
    %479 = vmatprep.subr.bf16.mxu0 0
    %480 = vmatpush1.bf16.msra.mxu0 0
    %481 = vmatprep.subr.bf16.mxu0 0
    %482 = vmatpush1.bf16.msra.mxu0 0
    %483 = vmatprep.subr.bf16.mxu0 0
    %484 = vmatpush1.bf16.msra.mxu0 0
    %485 = vmatprep.mubr.bf16.mxu0 0
    %486 = vmatmul.mubr.bf16.gmra.mrb[0].mxu0 %v395
    %v487 = vpop.f32.mrb[0].mxu0
    %v488 = vadd.f32 %v365, %v487
    %v489 = vpop.f32.mrb[0].mxu0
    %v490 = vadd.f32 %v369, %v489
    %v491 = vpop.f32.mrb[0].mxu0
    %v492 = vadd.f32 %v365, %v491
    %v493 = vpop.f32.mrb[0].mxu0
    %v494 = vadd.f32 %v369, %v493
    %495 = vmatprep.mubr.bf16.mxu0 0
    %496 = vmatmul.mubr.bf16.gmra.mrb[0].mxu0 %v398
    %v497 = vpop.f32.mrb[0].mxu0
    %v498 = vadd.f32 %v365, %v497
    %v499 = vpop.f32.mrb[0].mxu0
    %v500 = vadd.f32 %v369, %v499
    %v501 = vpop.f32.mrb[0].mxu0
    %v502 = vadd.f32 %v365, %v501
    %v503 = vpop.f32.mrb[0].mxu0
    %v504 = vadd.f32 %v369, %v503
    %505 = vdwg.mxu0
    %vm506 = vcmp.gt.f32.partialorder %v435, 0.0
    %vm507 = vcmp.gt.f32.partialorder %v437, 0.0
    %vm508 = vcmp.gt.f32.partialorder %v488, 0.0
    %vm509 = vcmp.gt.f32.partialorder %v490, 0.0
    %vm510 = vcmp.gt.f32.partialorder %v439, 0.0
    %vm511 = vcmp.gt.f32.partialorder %v441, 0.0
    %vm512 = vcmp.gt.f32.partialorder %v492, 0.0
    %vm513 = vcmp.gt.f32.partialorder %v494, 0.0
    %vm514 = vcmp.gt.f32.partialorder %v445, 0.0
    %vm515 = vcmp.gt.f32.partialorder %v447, 0.0
    %vm516 = vcmp.gt.f32.partialorder %v498, 0.0
    %vm517 = vcmp.gt.f32.partialorder %v500, 0.0
    %vm518 = vcmp.gt.f32.partialorder %v449, 0.0
    %vm519 = vcmp.gt.f32.partialorder %v451, 0.0
    %vm520 = vcmp.gt.f32.partialorder %v502, 0.0
    %vm521 = vcmp.gt.f32.partialorder %v504, 0.0
    %v522 = vmul.f32 %v435, 0.2
    %v523 = vmul.f32 %v437, 0.2
    %v524 = vmul.f32 %v488, 0.2
    %v525 = vmul.f32 %v490, 0.2
    %v526 = vmul.f32 %v439, 0.2
    %v527 = vmul.f32 %v441, 0.2
    %v528 = vmul.f32 %v492, 0.2
    %v529 = vmul.f32 %v494, 0.2
    %v530 = vmul.f32 %v445, 0.2
    %v531 = vmul.f32 %v447, 0.2
    %v532 = vmul.f32 %v498, 0.2
    %v533 = vmul.f32 %v500, 0.2
    %v534 = vmul.f32 %v449, 0.2
    %v535 = vmul.f32 %v451, 0.2
    %v536 = vmul.f32 %v502, 0.2
    %v537 = vmul.f32 %v504, 0.2
    %v538 = vsel %vm506, %v435, %v522
    %v539 = vsel %vm507, %v437, %v523
    %v540 = vsel %vm508, %v488, %v524
    %v541 = vsel %vm509, %v490, %v525
    %v542 = vsel %vm510, %v439, %v526
    %v543 = vsel %vm511, %v441, %v527
    %v544 = vsel %vm512, %v492, %v528
    %v545 = vsel %vm513, %v494, %v529
    %v546 = vsel %vm514, %v445, %v530
    %v547 = vsel %vm515, %v447, %v531
    %v548 = vsel %vm516, %v498, %v532
    %v549 = vsel %vm517, %v500, %v533
    %v550 = vsel %vm518, %v449, %v534
    %v551 = vsel %vm519, %v451, %v535
    %v552 = vsel %vm520, %v502, %v536
    %v553 = vsel %vm521, %v504, %v537
    %v554 = vpack.c.bf16 %v542, %v538
    %v555 = vpack.c.bf16 %v543, %v539
    %v556 = vpack.c.bf16 %v544, %v540
    %v557 = vpack.c.bf16 %v545, %v541
    %v558 = vpack.c.bf16 %v550, %v546
    %v559 = vpack.c.bf16 %v551, %v547
    %v560 = vpack.c.bf16 %v552, %v548
    %v561 = vpack.c.bf16 %v553, %v549
    %v562 = vld [vmem:[#allocation8] sm:$0xff]
    %v563 = vld [vmem:[#allocation8 + $0x8] sm:$0xff]
    %v564 = vld [vmem:[#allocation8 + $0x10] sm:$0xff]
    %v565 = vld [vmem:[#allocation8 + $0x18] sm:$0xff]
    %v566 = vld [vmem:[#allocation8 + $0x20] sm:$0xff]
    %v567 = vld [vmem:[#allocation8 + $0x28] sm:$0xff]
    %v568 = vld [vmem:[#allocation8 + $0x30] sm:$0xff]
    %v569 = vld [vmem:[#allocation8 + $0x38] sm:$0xff]
    %v570 = vld [vmem:[#allocation8 + $0x40] sm:$0xff]
    %v571 = vld [vmem:[#allocation8 + $0x48] sm:$0xff]
    %v572 = vld [vmem:[#allocation8 + $0x50] sm:$0xff]
    %v573 = vld [vmem:[#allocation8 + $0x58] sm:$0xff]
    %v574 = vld [vmem:[#allocation8 + $0x60] sm:$0xff]
    %v575 = vld [vmem:[#allocation8 + $0x68] sm:$0xff]
    %v576 = vld [vmem:[#allocation8 + $0x70] sm:$0xff]
    %v577 = vld [vmem:[#allocation8 + $0x78] sm:$0xff]
    %v578 = vld [vmem:[#allocation8 + $0x80] sm:$0xff]
    %v579 = vld [vmem:[#allocation8 + $0x88] sm:$0xff]
    %v580 = vld [vmem:[#allocation8 + $0x90] sm:$0xff]
    %v581 = vld [vmem:[#allocation8 + $0x98] sm:$0xff]
    %v582 = vld [vmem:[#allocation8 + $0xa0] sm:$0xff]
    %v583 = vld [vmem:[#allocation8 + $0xa8] sm:$0xff]
    %v584 = vld [vmem:[#allocation8 + $0xb0] sm:$0xff]
    %v585 = vld [vmem:[#allocation8 + $0xb8] sm:$0xff]
    %v586 = vld [vmem:[#allocation8 + $0xc0] sm:$0xff]
    %v587 = vld [vmem:[#allocation8 + $0xc8] sm:$0xff]
    %v588 = vld [vmem:[#allocation8 + $0xd0] sm:$0xff]
    %v589 = vld [vmem:[#allocation8 + $0xd8] sm:$0xff]
    %v590 = vld [vmem:[#allocation8 + $0xe0] sm:$0xff]
    %v591 = vld [vmem:[#allocation8 + $0xe8] sm:$0xff]
    %v592 = vld [vmem:[#allocation8 + $0xf0] sm:$0xff]
    %v593 = vld [vmem:[#allocation8 + $0xf8] sm:$0xff]
    %v594 = vld [vmem:[#allocation8 + $0x100] sm:$0xff]
    %v595 = vld [vmem:[#allocation8 + $0x108] sm:$0xff]
    %v596 = vld [vmem:[#allocation8 + $0x110] sm:$0xff]
    %v597 = vld [vmem:[#allocation8 + $0x118] sm:$0xff]
    %v598 = vld [vmem:[#allocation8 + $0x120] sm:$0xff]
    %v599 = vld [vmem:[#allocation8 + $0x128] sm:$0xff]
    %v600 = vld [vmem:[#allocation8 + $0x130] sm:$0xff]
    %v601 = vld [vmem:[#allocation8 + $0x138] sm:$0xff]
    %v602 = vld [vmem:[#allocation8 + $0x140] sm:$0xff]
    %v603 = vld [vmem:[#allocation8 + $0x148] sm:$0xff]
    %v604 = vld [vmem:[#allocation8 + $0x150] sm:$0xff]
    %v605 = vld [vmem:[#allocation8 + $0x158] sm:$0xff]
    %v606 = vld [vmem:[#allocation8 + $0x160] sm:$0xff]
    %v607 = vld [vmem:[#allocation8 + $0x168] sm:$0xff]
    %v608 = vld [vmem:[#allocation8 + $0x170] sm:$0xff]
    %v609 = vld [vmem:[#allocation8 + $0x178] sm:$0xff]
    %v610 = vld [vmem:[#allocation8 + $0x180] sm:$0xff]
    %v611 = vld [vmem:[#allocation8 + $0x188] sm:$0xff]
    %v612 = vld [vmem:[#allocation8 + $0x190] sm:$0xff]
    %v613 = vld [vmem:[#allocation8 + $0x198] sm:$0xff]
    %v614 = vld [vmem:[#allocation8 + $0x1a0] sm:$0xff]
    %v615 = vld [vmem:[#allocation8 + $0x1a8] sm:$0xff]
    %v616 = vld [vmem:[#allocation8 + $0x1b0] sm:$0xff]
    %v617 = vld [vmem:[#allocation8 + $0x1b8] sm:$0xff]
    %v618 = vld [vmem:[#allocation8 + $0x1c0] sm:$0xff]
    %v619 = vld [vmem:[#allocation8 + $0x1c8] sm:$0xff]
    %v620 = vld [vmem:[#allocation8 + $0x1d0] sm:$0xff]
    %v621 = vld [vmem:[#allocation8 + $0x1d8] sm:$0xff]
    %v622 = vld [vmem:[#allocation8 + $0x1e0] sm:$0xff]
    %v623 = vld [vmem:[#allocation8 + $0x1e8] sm:$0xff]
    %v624 = vld [vmem:[#allocation8 + $0x1f0] sm:$0xff]
    %v625 = vld [vmem:[#allocation8 + $0x1f8] sm:$0xff]
    %v626 = vld [vmem:[%s4] sm:$0x3]
    %v628 = vlaneseq
    %v629 = vshrl.u32 %v628, 7
    %v630 = vsub.s32 0, %v629
    %v631 = vrot.slane %v626, %v630
    %v632 = vlaneseq
    %v633 = vshrl.u32 %v632, 7
    %v634 = vsub.s32 1, %v633
    %v635 = vrot.slane %v626, %v634
    %v702 = vunpack.c.l.b16 %v562
    %v703 = vunpack.c.h.b16 %v562
    %v704 = vunpack.c.l.b16 %v563
    %v705 = vunpack.c.h.b16 %v563
    %v706 = vunpack.c.l.b16 %v564
    %v707 = vunpack.c.h.b16 %v564
    %v708 = vunpack.c.l.b16 %v565
    %v709 = vunpack.c.h.b16 %v565
    %v710 = vunpack.c.l.b16 %v566
    %v711 = vunpack.c.h.b16 %v566
    %v712 = vunpack.c.l.b16 %v567
    %v713 = vunpack.c.h.b16 %v567
    %v714 = vunpack.c.l.b16 %v568
    %v715 = vunpack.c.h.b16 %v568
    %v716 = vunpack.c.l.b16 %v569
    %v717 = vunpack.c.h.b16 %v569
    %v718 = vunpack.c.l.b16 %v570
    %v719 = vunpack.c.h.b16 %v570
    %v720 = vunpack.c.l.b16 %v571
    %v721 = vunpack.c.h.b16 %v571
    %v722 = vunpack.c.l.b16 %v572
    %v723 = vunpack.c.h.b16 %v572
    %v724 = vunpack.c.l.b16 %v573
    %v725 = vunpack.c.h.b16 %v573
    %v726 = vunpack.c.l.b16 %v574
    %v727 = vunpack.c.h.b16 %v574
    %v728 = vunpack.c.l.b16 %v575
    %v729 = vunpack.c.h.b16 %v575
    %v730 = vunpack.c.l.b16 %v576
    %v731 = vunpack.c.h.b16 %v576
    %v732 = vunpack.c.l.b16 %v577
    %v733 = vunpack.c.h.b16 %v577
    %v734 = vunpack.c.l.b16 %v578
    %v735 = vunpack.c.h.b16 %v578
    %v736 = vunpack.c.l.b16 %v579
    %v737 = vunpack.c.h.b16 %v579
    %v738 = vunpack.c.l.b16 %v580
    %v739 = vunpack.c.h.b16 %v580
    %v740 = vunpack.c.l.b16 %v581
    %v741 = vunpack.c.h.b16 %v581
    %v742 = vunpack.c.l.b16 %v582
    %v743 = vunpack.c.h.b16 %v582
    %v744 = vunpack.c.l.b16 %v583
    %v745 = vunpack.c.h.b16 %v583
    %v746 = vunpack.c.l.b16 %v584
    %v747 = vunpack.c.h.b16 %v584
    %v748 = vunpack.c.l.b16 %v585
    %v749 = vunpack.c.h.b16 %v585
    %v750 = vunpack.c.l.b16 %v586
    %v751 = vunpack.c.h.b16 %v586
    %v752 = vunpack.c.l.b16 %v587
    %v753 = vunpack.c.h.b16 %v587
    %v754 = vunpack.c.l.b16 %v588
    %v755 = vunpack.c.h.b16 %v588
    %v756 = vunpack.c.l.b16 %v589
    %v757 = vunpack.c.h.b16 %v589
    %v758 = vunpack.c.l.b16 %v590
    %v759 = vunpack.c.h.b16 %v590
    %v760 = vunpack.c.l.b16 %v591
    %v761 = vunpack.c.h.b16 %v591
    %v762 = vunpack.c.l.b16 %v592
    %v763 = vunpack.c.h.b16 %v592
    %v764 = vunpack.c.l.b16 %v593
    %v765 = vunpack.c.h.b16 %v593
    %v766 = vunpack.c.l.b16 %v594
    %v767 = vunpack.c.h.b16 %v594
    %v768 = vunpack.c.l.b16 %v595
    %v769 = vunpack.c.h.b16 %v595
    %v770 = vunpack.c.l.b16 %v596
    %v771 = vunpack.c.h.b16 %v596
    %v772 = vunpack.c.l.b16 %v597
    %v773 = vunpack.c.h.b16 %v597
    %v774 = vunpack.c.l.b16 %v598
    %v775 = vunpack.c.h.b16 %v598
    %v776 = vunpack.c.l.b16 %v599
    %v777 = vunpack.c.h.b16 %v599
    %v778 = vunpack.c.l.b16 %v600
    %v779 = vunpack.c.h.b16 %v600
    %v780 = vunpack.c.l.b16 %v601
    %v781 = vunpack.c.h.b16 %v601
    %v782 = vunpack.c.l.b16 %v602
    %v783 = vunpack.c.h.b16 %v602
    %v784 = vunpack.c.l.b16 %v603
    %v785 = vunpack.c.h.b16 %v603
    %v786 = vunpack.c.l.b16 %v604
    %v787 = vunpack.c.h.b16 %v604
    %v788 = vunpack.c.l.b16 %v605
    %v789 = vunpack.c.h.b16 %v605
    %v790 = vunpack.c.l.b16 %v606
    %v791 = vunpack.c.h.b16 %v606
    %v792 = vunpack.c.l.b16 %v607
    %v793 = vunpack.c.h.b16 %v607
    %v794 = vunpack.c.l.b16 %v608
    %v795 = vunpack.c.h.b16 %v608
    %v796 = vunpack.c.l.b16 %v609
    %v797 = vunpack.c.h.b16 %v609
    %v798 = vunpack.c.l.b16 %v610
    %v799 = vunpack.c.h.b16 %v610
    %v800 = vunpack.c.l.b16 %v611
    %v801 = vunpack.c.h.b16 %v611
    %v802 = vunpack.c.l.b16 %v612
    %v803 = vunpack.c.h.b16 %v612
    %v804 = vunpack.c.l.b16 %v613
    %v805 = vunpack.c.h.b16 %v613
    %v806 = vunpack.c.l.b16 %v614
    %v807 = vunpack.c.h.b16 %v614
    %v808 = vunpack.c.l.b16 %v615
    %v809 = vunpack.c.h.b16 %v615
    %v810 = vunpack.c.l.b16 %v616
    %v811 = vunpack.c.h.b16 %v616
    %v812 = vunpack.c.l.b16 %v617
    %v813 = vunpack.c.h.b16 %v617
    %v814 = vunpack.c.l.b16 %v618
    %v815 = vunpack.c.h.b16 %v618
    %v816 = vunpack.c.l.b16 %v619
    %v817 = vunpack.c.h.b16 %v619
    %v818 = vunpack.c.l.b16 %v620
    %v819 = vunpack.c.h.b16 %v620
    %v820 = vunpack.c.l.b16 %v621
    %v821 = vunpack.c.h.b16 %v621
    %v822 = vunpack.c.l.b16 %v622
    %v823 = vunpack.c.h.b16 %v622
    %v824 = vunpack.c.l.b16 %v623
    %v825 = vunpack.c.h.b16 %v623
    %v826 = vunpack.c.l.b16 %v624
    %v827 = vunpack.c.h.b16 %v624
    %v828 = vunpack.c.l.b16 %v625
    %v829 = vunpack.c.h.b16 %v625
    %v830 = vpack.c.b16 %v704, %v702
    %v831 = vpack.c.b16 %v705, %v703
    %v832 = vpack.c.b16 %v708, %v706
    %v833 = vpack.c.b16 %v709, %v707
    %v834 = vpack.c.b16 %v712, %v710
    %v835 = vpack.c.b16 %v713, %v711
    %v836 = vpack.c.b16 %v716, %v714
    %v837 = vpack.c.b16 %v717, %v715
    %v838 = vpack.c.b16 %v720, %v718
    %v839 = vpack.c.b16 %v721, %v719
    %v840 = vpack.c.b16 %v724, %v722
    %v841 = vpack.c.b16 %v725, %v723
    %v842 = vpack.c.b16 %v728, %v726
    %v843 = vpack.c.b16 %v729, %v727
    %v844 = vpack.c.b16 %v732, %v730
    %v845 = vpack.c.b16 %v733, %v731
    %v846 = vpack.c.b16 %v736, %v734
    %v847 = vpack.c.b16 %v737, %v735
    %v848 = vpack.c.b16 %v740, %v738
    %v849 = vpack.c.b16 %v741, %v739
    %v850 = vpack.c.b16 %v744, %v742
    %v851 = vpack.c.b16 %v745, %v743
    %v852 = vpack.c.b16 %v748, %v746
    %v853 = vpack.c.b16 %v749, %v747
    %v854 = vpack.c.b16 %v752, %v750
    %v855 = vpack.c.b16 %v753, %v751
    %v856 = vpack.c.b16 %v756, %v754
    %v857 = vpack.c.b16 %v757, %v755
    %v858 = vpack.c.b16 %v760, %v758
    %v859 = vpack.c.b16 %v761, %v759
    %v860 = vpack.c.b16 %v764, %v762
    %v861 = vpack.c.b16 %v765, %v763
    %v862 = vpack.c.b16 %v768, %v766
    %v863 = vpack.c.b16 %v769, %v767
    %v864 = vpack.c.b16 %v772, %v770
    %v865 = vpack.c.b16 %v773, %v771
    %v866 = vpack.c.b16 %v776, %v774
    %v867 = vpack.c.b16 %v777, %v775
    %v868 = vpack.c.b16 %v780, %v778
    %v869 = vpack.c.b16 %v781, %v779
    %v870 = vpack.c.b16 %v784, %v782
    %v871 = vpack.c.b16 %v785, %v783
    %v872 = vpack.c.b16 %v788, %v786
    %v873 = vpack.c.b16 %v789, %v787
    %v874 = vpack.c.b16 %v792, %v790
    %v875 = vpack.c.b16 %v793, %v791
    %v876 = vpack.c.b16 %v796, %v794
    %v877 = vpack.c.b16 %v797, %v795
    %v878 = vpack.c.b16 %v800, %v798
    %v879 = vpack.c.b16 %v801, %v799
    %v880 = vpack.c.b16 %v804, %v802
    %v881 = vpack.c.b16 %v805, %v803
    %v882 = vpack.c.b16 %v808, %v806
    %v883 = vpack.c.b16 %v809, %v807
    %v884 = vpack.c.b16 %v812, %v810
    %v885 = vpack.c.b16 %v813, %v811
    %v886 = vpack.c.b16 %v816, %v814
    %v887 = vpack.c.b16 %v817, %v815
    %v888 = vpack.c.b16 %v820, %v818
    %v889 = vpack.c.b16 %v821, %v819
    %v890 = vpack.c.b16 %v824, %v822
    %v891 = vpack.c.b16 %v825, %v823
    %v892 = vpack.c.b16 %v828, %v826
    %v893 = vpack.c.b16 %v829, %v827
    %958 = vmatprep.subr.bf16.mxu0 %v831
    %959 = vmatpush1.bf16.msra.mxu0 %v830
    %960 = vmatprep.subr.bf16.mxu0 %v833
    %961 = vmatpush1.bf16.msra.mxu0 %v832
    %962 = vmatprep.subr.bf16.mxu0 %v835
    %963 = vmatpush1.bf16.msra.mxu0 %v834
    %964 = vmatprep.subr.bf16.mxu0 %v837
    %965 = vmatpush1.bf16.msra.mxu0 %v836
    %966 = vmatprep.subr.bf16.mxu0 %v839
    %967 = vmatpush1.bf16.msra.mxu0 %v838
    %968 = vmatprep.subr.bf16.mxu0 %v841
    %969 = vmatpush1.bf16.msra.mxu0 %v840
    %970 = vmatprep.subr.bf16.mxu0 %v843
    %971 = vmatpush1.bf16.msra.mxu0 %v842
    %972 = vmatprep.subr.bf16.mxu0 %v845
    %973 = vmatpush1.bf16.msra.mxu0 %v844
    %974 = vmatprep.subr.bf16.mxu0 %v847
    %975 = vmatpush1.bf16.msra.mxu0 %v846
    %976 = vmatprep.subr.bf16.mxu0 %v849
    %977 = vmatpush1.bf16.msra.mxu0 %v848
    %978 = vmatprep.subr.bf16.mxu0 %v851
    %979 = vmatpush1.bf16.msra.mxu0 %v850
    %980 = vmatprep.subr.bf16.mxu0 %v853
    %981 = vmatpush1.bf16.msra.mxu0 %v852
    %982 = vmatprep.subr.bf16.mxu0 %v855
    %983 = vmatpush1.bf16.msra.mxu0 %v854
    %984 = vmatprep.subr.bf16.mxu0 %v857
    %985 = vmatpush1.bf16.msra.mxu0 %v856
    %986 = vmatprep.subr.bf16.mxu0 %v859
    %987 = vmatpush1.bf16.msra.mxu0 %v858
    %988 = vmatprep.subr.bf16.mxu0 %v861
    %989 = vmatpush1.bf16.msra.mxu0 %v860
    %990 = vmatprep.mubr.bf16.mxu0 %v555
    %991 = vmatmul.mubr.bf16.gmra.mrb[0].mxu0 %v554
    %v992 = vpop.f32.mrb[0].mxu0
    %v993 = vadd.f32 %v631, %v992
    %v994 = vpop.f32.mrb[0].mxu0
    %v995 = vadd.f32 %v635, %v994
    %v996 = vpop.f32.mrb[0].mxu0
    %v997 = vadd.f32 %v631, %v996
    %v998 = vpop.f32.mrb[0].mxu0
    %v999 = vadd.f32 %v635, %v998
    %1000 = vmatprep.mubr.bf16.mxu0 %v559
    %1001 = vmatmul.mubr.bf16.gmra.mrb[0].mxu0 %v558
    %v1002 = vpop.f32.mrb[0].mxu0
    %v1003 = vadd.f32 %v631, %v1002
    %v1004 = vpop.f32.mrb[0].mxu0
    %v1005 = vadd.f32 %v635, %v1004
    %v1006 = vpop.f32.mrb[0].mxu0
    %v1007 = vadd.f32 %v631, %v1006
    %v1008 = vpop.f32.mrb[0].mxu0
    %v1009 = vadd.f32 %v635, %v1008
    %1010 = vdwg.mxu0
    %1011 = vmatprep.subr.bf16.mxu0 %v863
    %1012 = vmatpush1.bf16.msra.mxu0 %v862
    %1013 = vmatprep.subr.bf16.mxu0 %v865
    %1014 = vmatpush1.bf16.msra.mxu0 %v864
    %1015 = vmatprep.subr.bf16.mxu0 %v867
    %1016 = vmatpush1.bf16.msra.mxu0 %v866
    %1017 = vmatprep.subr.bf16.mxu0 %v869
    %1018 = vmatpush1.bf16.msra.mxu0 %v868
    %1019 = vmatprep.subr.bf16.mxu0 %v871
    %1020 = vmatpush1.bf16.msra.mxu0 %v870
    %1021 = vmatprep.subr.bf16.mxu0 %v873
    %1022 = vmatpush1.bf16.msra.mxu0 %v872
    %1023 = vmatprep.subr.bf16.mxu0 %v875
    %1024 = vmatpush1.bf16.msra.mxu0 %v874
    %1025 = vmatprep.subr.bf16.mxu0 %v877
    %1026 = vmatpush1.bf16.msra.mxu0 %v876
    %1027 = vmatprep.subr.bf16.mxu0 %v879
    %1028 = vmatpush1.bf16.msra.mxu0 %v878
    %1029 = vmatprep.subr.bf16.mxu0 %v881
    %1030 = vmatpush1.bf16.msra.mxu0 %v880
    %1031 = vmatprep.subr.bf16.mxu0 %v883
    %1032 = vmatpush1.bf16.msra.mxu0 %v882
    %1033 = vmatprep.subr.bf16.mxu0 %v885
    %1034 = vmatpush1.bf16.msra.mxu0 %v884
    %1035 = vmatprep.subr.bf16.mxu0 %v887
    %1036 = vmatpush1.bf16.msra.mxu0 %v886
    %1037 = vmatprep.subr.bf16.mxu0 %v889
    %1038 = vmatpush1.bf16.msra.mxu0 %v888
    %1039 = vmatprep.subr.bf16.mxu0 %v891
    %1040 = vmatpush1.bf16.msra.mxu0 %v890
    %1041 = vmatprep.subr.bf16.mxu0 %v893
    %1042 = vmatpush1.bf16.msra.mxu0 %v892
    %1043 = vmatprep.mubr.bf16.mxu0 %v557
    %1044 = vmatmul.mubr.bf16.gmra.mrb[0].mxu0 %v556
    %v1045 = vpop.f32.mrb[0].mxu0
    %v1046 = vadd.f32 %v993, %v1045
    %v1047 = vpop.f32.mrb[0].mxu0
    %v1048 = vadd.f32 %v995, %v1047
    %v1049 = vpop.f32.mrb[0].mxu0
    %v1050 = vadd.f32 %v997, %v1049
    %v1051 = vpop.f32.mrb[0].mxu0
    %v1052 = vadd.f32 %v999, %v1051
    %1053 = vmatprep.mubr.bf16.mxu0 %v561
    %1054 = vmatmul.mubr.bf16.gmra.mrb[0].mxu0 %v560
    %v1055 = vpop.f32.mrb[0].mxu0
    %v1056 = vadd.f32 %v1003, %v1055
    %v1057 = vpop.f32.mrb[0].mxu0
    %v1058 = vadd.f32 %v1005, %v1057
    %v1059 = vpop.f32.mrb[0].mxu0
    %v1060 = vadd.f32 %v1007, %v1059
    %v1061 = vpop.f32.mrb[0].mxu0
    %v1062 = vadd.f32 %v1009, %v1061
    %1063 = vdwg.mxu0
    %vm1064 = vcmp.gt.f32.partialorder %v1046, 0.0
    %vm1065 = vcmp.gt.f32.partialorder %v1048, 0.0
    %vm1066 = vcmp.gt.f32.partialorder %v1050, 0.0
    %vm1067 = vcmp.gt.f32.partialorder %v1052, 0.0
    %vm1068 = vcmp.gt.f32.partialorder %v1056, 0.0
    %vm1069 = vcmp.gt.f32.partialorder %v1058, 0.0
    %vm1070 = vcmp.gt.f32.partialorder %v1060, 0.0
    %vm1071 = vcmp.gt.f32.partialorder %v1062, 0.0
    %v1072 = vmul.f32 %v1046, 0.2
    %v1073 = vmul.f32 %v1048, 0.2
    %v1074 = vmul.f32 %v1050, 0.2
    %v1075 = vmul.f32 %v1052, 0.2
    %v1076 = vmul.f32 %v1056, 0.2
    %v1077 = vmul.f32 %v1058, 0.2
    %v1078 = vmul.f32 %v1060, 0.2
    %v1079 = vmul.f32 %v1062, 0.2
    %v1080 = vsel %vm1064, %v1046, %v1072
    %v1081 = vsel %vm1065, %v1048, %v1073
    %v1082 = vsel %vm1066, %v1050, %v1074
    %v1083 = vsel %vm1067, %v1052, %v1075
    %v1084 = vsel %vm1068, %v1056, %v1076
    %v1085 = vsel %vm1069, %v1058, %v1077
    %v1086 = vsel %vm1070, %v1060, %v1078
    %v1087 = vsel %vm1071, %v1062, %v1079
    %v1088 = vld [vmem:[%s5] sm:$0x3]
    %v1089 = vld [vmem:[#allocation2] sm:$0x1]
    %1091 = vset.pattern.permute.xlu0 0
    %1092 = vperm.xlu0 %1091, %v1089
    %v1093 = vpop.permute.xlu0 %1092
    %v1095 = vlaneseq
    %v1096 = vshrl.u32 %v1095, 7
    %v1097 = vsub.s32 0, %v1096
    %v1098 = vrot.slane %v1093, %v1097
    %v1100 = vlaneseq
    %v1101 = vshrl.u32 %v1100, 7
    %v1102 = vsub.s32 0, %v1101
    %v1103 = vrot.slane %v1088, %v1102
    %v1104 = vlaneseq
    %v1105 = vshrl.u32 %v1104, 7
    %v1106 = vsub.s32 1, %v1105
    %v1107 = vrot.slane %v1088, %v1106
    %1110 = vmatprep.subr.mxu0 %v1081
    %1111 = vmatpush1.xpose.msra.mxu0 %v1080
    %1112 = vmatprep.subr.mxu0 %v1083
    %1113 = vmatpush1.xpose.msra.mxu0 %v1082
    %1114 = vmatprep.subr.mxu0 %v1085
    %1115 = vmatpush1.xpose.msra.mxu0 %v1084
    %1116 = vmatprep.subr.mxu0 %v1087
    %1117 = vmatpush1.xpose.msra.mxu0 %v1086
    %1118 = vmatprep.subr.mxu0 0.0
    %1119 = vmatpush1.xpose.msra.mxu0 0.0
    %1120 = vmatprep.subr.mxu0 0.0
    %1121 = vmatpush1.xpose.msra.mxu0 0.0
    %1122 = vmatprep.subr.mxu0 0.0
    %1123 = vmatpush1.xpose.msra.mxu0 0.0
    %1124 = vmatprep.subr.mxu0 0.0
    %1125 = vmatpush1.xpose.msra.mxu0 0.0
    %1126 = vmatprep.subr.mxu0 0.0
    %1127 = vmatpush1.xpose.msra.mxu0 0.0
    %1128 = vmatprep.subr.mxu0 0.0
    %1129 = vmatpush1.xpose.msra.mxu0 0.0
    %1130 = vmatprep.subr.mxu0 0.0
    %1131 = vmatpush1.xpose.msra.mxu0 0.0
    %1132 = vmatprep.subr.mxu0 0.0
    %1133 = vmatpush1.xpose.msra.mxu0 0.0
    %1134 = vmatprep.subr.mxu0 0.0
    %1135 = vmatpush1.xpose.msra.mxu0 0.0
    %1136 = vmatprep.subr.mxu0 0.0
    %1137 = vmatpush1.xpose.msra.mxu0 0.0
    %1138 = vmatprep.subr.mxu0 0.0
    %1139 = vmatpush1.xpose.msra.mxu0 0.0
    %1140 = vmatprep.subr.mxu0 0.0
    %1141 = vmatpush1.xpose.msra.mxu0 0.0
    %1142 = vmatprep.subr.mxu0 0.0
    %1143 = vmatpush1.xpose.msra.mxu0 0.0
    %1144 = vmatprep.subr.mxu0 0.0
    %1145 = vmatpush1.xpose.msra.mxu0 0.0
    %1146 = vmatprep.subr.mxu0 0.0
    %1147 = vmatpush1.xpose.msra.mxu0 0.0
    %1148 = vmatprep.subr.mxu0 0.0
    %1149 = vmatpush1.xpose.msra.mxu0 0.0
    %1150 = vmatprep.subr.mxu0 0.0
    %1151 = vmatpush1.xpose.msra.mxu0 0.0
    %1152 = vmatprep.subr.mxu0 0.0
    %1153 = vmatpush1.xpose.msra.mxu0 0.0
    %1154 = vmatprep.subr.mxu0 0.0
    %1155 = vmatpush1.xpose.msra.mxu0 0.0
    %1156 = vmatprep.subr.mxu0 0.0
    %1157 = vmatpush1.xpose.msra.mxu0 0.0
    %1158 = vmatprep.subr.mxu0 0.0
    %1159 = vmatpush1.xpose.msra.mxu0 0.0
    %1160 = vmatprep.subr.mxu0 0.0
    %1161 = vmatpush1.xpose.msra.mxu0 0.0
    %1162 = vmatprep.subr.mxu0 0.0
    %1163 = vmatpush1.xpose.msra.mxu0 0.0
    %1164 = vmatprep.subr.mxu0 0.0
    %1165 = vmatpush1.xpose.msra.mxu0 0.0
    %1166 = vmatprep.subr.mxu0 0.0
    %1167 = vmatpush1.xpose.msra.mxu0 0.0
    %1168 = vmatprep.subr.mxu0 0.0
    %1169 = vmatpush1.xpose.msra.mxu0 0.0
    %1170 = vmatprep.subr.mxu0 0.0
    %1171 = vmatpush1.xpose.msra.mxu0 0.0
    %1172 = vmatprep.subr.mxu0 0.0
    %1173 = vmatpush1.xpose.msra.mxu0 0.0
    %1174 = vmatprep.mubr.f32.mxu0 %v1107
    %1175 = vmatmul.mubr.f32.gmra.mrb[0].mxu0 %v1103
    %v1176 = vpop.f32.mrb[0].mxu0
    %v1177 = vadd.f32 %v1098, %v1176
    %v1178 = vpop.f32.mrb[0].mxu0
    %1179 = vdwg.mxu0
    %v1180 = vsub.f32 0.0, %v1177
    %v1181 = vmul.f32 %v1180, 1.442695
    %v1182 = vpow.pop %v1181
    %v1183 = vadd.f32 %v1182, 1.0
    %v1184 = vrcp.pop %v1183
    %vm1185 = vcmask 253952
    %1186 = vst.msk [vmem:[#allocation9] sm:$0x1] %vm1185, %v1184
    // Predicated region
    $region42: #{tpu_custom_call.1} parent=1 // pred_check
      _
    $region43: #{tpu_custom_call.1} parent=1 // pred_check_branch
      %1188 = sbr.rel (0) target = $region45
    $region44: #{tpu_custom_call.1} parent=1 // pred_region
      %s1190 = ssub.s32 16, 16
      %1191 = vsyncadd [#allocation5], %s1190
      %s1193 = sshll.u32 [#allocation9], 4
      %s1194 = int_to_ptr.vmem [resolvable:$true] %s1193
      %1196 = dma.vmem_to_hbm [thread:$0]  %s1194, 16, %s7, [#allocation5]
    $region45: #{tpu_custom_call.1} parent=1 // pred_fallthru
      _
    // Predicated region
    $region46: #{tpu_custom_call.1} parent=1 // pred_check
      _
    $region47: #{tpu_custom_call.1} parent=1 // pred_check_branch
      %1198 = sbr.rel (0) target = $region49
    $region48: #{tpu_custom_call.1} parent=1 // pred_region
      %1199 = dma.done [#allocation5], 16
    $region49: #{tpu_custom_call.1} parent=1 // pred_fallthru
      _
    %1200 = vsyncpa [#allocation4], 1
    %1201 = vsyncpa [#allocation7], 1
    %1202 = vsyncpa [#allocation5], 1

</llo_original>
